<compile_context>
chip_gen: v7x
topology: tpu7x:2x2x1
jax: 0.10.0
libtpu: 0.0.40
codegen_flags: <defaults>
</compile_context>

<pallas_src>
import functools

import jax
import jax.numpy as jnp
from jax.experimental import pallas as pl
from jax.experimental.pallas import tpu as pltpu


# ---------------------------------------------------------------------------
# Kernel: one batch element per grid step (all heads fused).
#   xg_ref : (heads*t, s)   head-major grouped activations (f32 in VMEM)
#   wqkv_ref: (3, s, s)     [wq.T * c, wk.T * c, wv.T]   (bf16, c = emb**-0.25)
#   wu_ref : (heads*s, emb) unifyheads weight, pre-transposed (bf16)
#   bu_ref : (1, emb)       unifyheads bias (f32)
#   o_ref  : (t, emb)       output block
# ---------------------------------------------------------------------------
def _attn_kernel(xg_ref, wqkv_ref, wu_ref, bu_ref, o_ref, *,
                 heads, seq, head_dim, mask):
    h, t, s = heads, seq, head_dim

    # --- QKV projection: big-M matmuls on the MXU (bf16 in, f32 acc) -------
    x2 = xg_ref[...].astype(jnp.bfloat16)                       # (h*t, s)
    q = jnp.dot(x2, wqkv_ref[0], preferred_element_type=jnp.float32)
    k = jnp.dot(x2, wqkv_ref[1], preferred_element_type=jnp.float32)
    v = jnp.dot(x2, wqkv_ref[2], preferred_element_type=jnp.float32)
    # tile-aligned leading-dim splits (t % 8 == 0 -> metadata-only reshape)
    q = q.reshape(h, t, s).astype(jnp.bfloat16)
    k = k.reshape(h, t, s).astype(jnp.bfloat16)
    v = v.reshape(h, t, s).astype(jnp.bfloat16)

    # --- attention: the only inherently head-batched stage -----------------
    scores = jnp.einsum('hqs,hks->hqk', q, k,
                        preferred_element_type=jnp.float32)     # (h, t, t) f32
    if mask:
        # torch mask_(..., mask_diagonal=False): key position > query position
        qi = jax.lax.broadcasted_iota(jnp.int32, (t, t), 0)
        ki = jax.lax.broadcasted_iota(jnp.int32, (t, t), 1)
        scores = jnp.where((ki > qi)[None, :, :], -1e30, scores)

    # exact softmax over the key axis, f32 throughout; divide on the EUP
    m = jnp.max(scores, axis=-1, keepdims=True)
    p = jnp.exp(scores - m)
    inv = pl.reciprocal(jnp.sum(p, axis=-1, keepdims=True), approx=True)
    att = (p * inv).astype(jnp.bfloat16)

    out = jnp.einsum('hqk,hks->hqs', att, v,
                     preferred_element_type=jnp.float32)        # (h, t, s) f32

    # --- unifyheads: interleave heads into lanes, one K = emb matmul -------
    out_cat = jnp.concatenate([out[i] for i in range(h)], axis=-1)   # (t, h*s)
    y = jnp.dot(out_cat.astype(jnp.bfloat16), wu_ref[...],
                preferred_element_type=jnp.float32)                  # (t, emb)
    o_ref[...] = y + bu_ref[...]                                     # fused bias


# ---------------------------------------------------------------------------
# Host-side weight preparation (one-time re-layout; identical numerics up to
# the bf16 cast of the MXU operands)
# ---------------------------------------------------------------------------
def prepare_kernel_params(params, *, emb, heads):
    s = emb // heads
    c = float(emb) ** -0.25
    # nn.Linear computes x @ W.T -> store W.T so the kernel never transposes.
    wqkv = jnp.stack([params['wq'].T * c,          # scaling folded into q / k
                      params['wk'].T * c,
                      params['wv'].T], axis=0).astype(jnp.bfloat16)   # (3, s, s)
    wu_t = params['wu'].T.astype(jnp.bfloat16)                        # (h*s, emb)
    bu = params['bu'].reshape(1, emb).astype(jnp.float32)             # (1, emb)
    return wqkv, wu_t, bu


def self_attention_narrow(x, kparams, *, heads, mask=False):
    """Pallas forward of SelfAttentionNarrow for x of shape (batch, seq, emb)."""
    b, t, e = x.shape
    s = e // heads
    wqkv, wu_t, bu = kparams

    # One head-major regroup of the activations (cheap XLA relayout) so the
    # in-kernel QKV matmul gets a fused M = heads*t and all reshapes are
    # tile-aligned.
    xg = x.astype(jnp.float32).reshape(b, t, heads, s)
    xg = xg.transpose(0, 2, 1, 3).reshape(b, heads * t, s)        # (b, h*t, s)

    kernel = functools.partial(_attn_kernel, heads=heads, seq=t, head_dim=s,
                               mask=mask)
    return pl.pallas_call(
        kernel,
        out_shape=jax.ShapeDtypeStruct((b, t, e), jnp.float32),
        grid=(b,),                                  # one batch element / step
        in_specs=[
            # activations: one (h*t, s) slab per batch element (pipelined)
            pl.BlockSpec((None, heads * t, s), lambda i: (i, 0, 0)),
            # weights / bias: constant index_map -> DMA'd into VMEM once
            pl.BlockSpec((3, s, s), lambda i: (0, 0, 0)),
            pl.BlockSpec((heads * s, e), lambda i: (0, 0)),
            pl.BlockSpec((1, e), lambda i: (0, 0)),
        ],
        out_specs=pl.BlockSpec((None, t, e), lambda i: (i, 0, 0)),
        compiler_params=pltpu.CompilerParams(
            dimension_semantics=("parallel",)),     # both TCs on v7x get work
    )(xg, wqkv, wu_t, bu)


# ---------------------------------------------------------------------------
# Pure-JAX reference (direct transcription of the PyTorch forward, f32)
# ---------------------------------------------------------------------------
def reference_forward(x, params, *, heads, mask=False):
    b, t, e = x.shape
    s = e // heads
    hp = jax.lax.Precision.HIGHEST
    x4 = x.reshape(b, t, heads, s)
    keys = jnp.einsum('bths,rs->bthr', x4, params['wk'], precision=hp)
    queries = jnp.einsum('bths,rs->bthr', x4, params['wq'], precision=hp)
    values = jnp.einsum('bths,rs->bthr', x4, params['wv'], precision=hp)
    keys = keys.transpose(0, 2, 1, 3).reshape(b * heads, t, s)
    queries = queries.transpose(0, 2, 1, 3).reshape(b * heads, t, s)
    values = values.transpose(0, 2, 1, 3).reshape(b * heads, t, s)
    queries = queries / e ** 0.25
    keys = keys / e ** 0.25
    dot = jnp.einsum('gts,gks->gtk', queries, keys, precision=hp)
    if mask:
        qi = jax.lax.broadcasted_iota(jnp.int32, (t, t), 0)
        ki = jax.lax.broadcasted_iota(jnp.int32, (t, t), 1)
        dot = jnp.where((ki > qi)[None, :, :], -jnp.inf, dot)
    dot = jax.nn.softmax(dot, axis=2)
    out = jnp.einsum('gtk,gks->gts', dot, values, precision=hp)
    out = out.reshape(b, heads, t, s).transpose(0, 2, 1, 3).reshape(b, t, heads * s)
    return jnp.einsum('btf,of->bto', out, params['wu'], precision=hp) + params['bu']


if __name__ == "__main__":
    B, SEQ, EMB, HEADS = 2, 8, 32, 4          # emb % heads == 0, head_dim s = 8
    S = EMB // HEADS

    key = jax.random.PRNGKey(0)
    kx, kq, kk, kv, ku, kb = jax.random.split(key, 6)
    params = {
        'wq': jax.random.normal(kq, (S, S), jnp.float32) / jnp.sqrt(S),
        'wk': jax.random.normal(kk, (S, S), jnp.float32) / jnp.sqrt(S),
        'wv': jax.random.normal(kv, (S, S), jnp.float32) / jnp.sqrt(S),
        'wu': jax.random.normal(ku, (EMB, HEADS * S), jnp.float32) / jnp.sqrt(EMB),
        'bu': 0.1 * jax.random.normal(kb, (EMB,), jnp.float32),
    }
    x = jax.random.normal(kx, (B, SEQ, EMB), jnp.float32)

    kparams = prepare_kernel_params(params, emb=EMB, heads=HEADS)

    for use_mask in (False, True):            # module default is mask=False
        fwd = jax.jit(functools.partial(self_attention_narrow,
                                        heads=HEADS, mask=use_mask))
        y = fwd(x, kparams)
        jax.block_until_ready(y)
        y_ref = reference_forward(x, params, heads=HEADS, mask=use_mask)
        assert y.shape == (B, SEQ, EMB)
        assert bool(jnp.all(jnp.isfinite(y)))
        # bf16 MXU operands with f32 accumulation -> 2e-2 tolerance vs f32 ref
        err = float(jnp.max(jnp.abs(y - y_ref)))
        assert bool(jnp.allclose(y, y_ref, atol=2e-2, rtol=2e-2)), err

    print("KERNEL_OK")
</pallas_src>

<mosaic_0001>
module attributes {stable_mosaic.version = 11 : i64} {
  func.func @_attn_kernel(%arg0: i32, %arg1: memref<1x32x8xf32, #tpu.memory_space<vmem>>, %arg2: memref<3x8x8xbf16, #tpu.memory_space<vmem>>, %arg3: memref<32x32xbf16, #tpu.memory_space<vmem>>, %arg4: memref<1x32xf32, #tpu.memory_space<vmem>>, %arg5: memref<1x8x32xf32, #tpu.memory_space<vmem>>) attributes {dimension_semantics = [#tpu.dimension_semantics<parallel>], iteration_bounds = array<i64: 2>, scalar_prefetch = 0 : i64, scratch_operands = 0 : i64, tpu.core_type = #tpu.core_type<tc>, window_params = [{transform_indices = @transform_0, window_bounds = array<i64: 1, 32, 8>}, {pipeline_mode = #tpu.pipeline_mode<synchronous>, transform_indices = @transform_1, window_bounds = array<i64: 3, 8, 8>}, {pipeline_mode = #tpu.pipeline_mode<synchronous>, transform_indices = @transform_2, window_bounds = array<i64: 32, 32>}, {pipeline_mode = #tpu.pipeline_mode<synchronous>, transform_indices = @transform_3, window_bounds = array<i64: 1, 32>}, {transform_indices = @transform_4, window_bounds = array<i64: 1, 8, 32>}]} {
    %c0 = arith.constant 0 : index
    %c0_0 = arith.constant 0 : index
    %c0_1 = arith.constant 0 : index
    %0 = vector.load %arg1[%c0, %c0_0, %c0_1] : memref<1x32x8xf32, #tpu.memory_space<vmem>>, vector<1x32x8xf32>
    %1 = vector.shape_cast %0 : vector<1x32x8xf32> to vector<32x8xf32>
    %2 = arith.truncf %1 : vector<32x8xf32> to vector<32x8xbf16>
    %c0_2 = arith.constant 0 : index
    %c0_3 = arith.constant 0 : index
    %c0_4 = arith.constant 0 : index
    %3 = vector.load %arg2[%c0_2, %c0_3, %c0_4] : memref<3x8x8xbf16, #tpu.memory_space<vmem>>, vector<1x8x8xbf16>
    %4 = vector.shape_cast %3 : vector<1x8x8xbf16> to vector<8x8xbf16>
    %cst = arith.constant dense<0.000000e+00> : vector<32x8xf32>
    %5 = tpu.matmul %2, %4, %cst {dimension_numbers = #tpu.dot_dimension_numbers<[1], [0], [0], [1], [0, 0, 1, 1], [], []>} : vector<32x8xbf16>, vector<8x8xbf16>, vector<32x8xf32> -> vector<32x8xf32>
    %c1 = arith.constant 1 : index
    %c0_5 = arith.constant 0 : index
    %c0_6 = arith.constant 0 : index
    %6 = vector.load %arg2[%c1, %c0_5, %c0_6] : memref<3x8x8xbf16, #tpu.memory_space<vmem>>, vector<1x8x8xbf16>
    %7 = vector.shape_cast %6 : vector<1x8x8xbf16> to vector<8x8xbf16>
    %cst_7 = arith.constant dense<0.000000e+00> : vector<32x8xf32>
    %8 = tpu.matmul %2, %7, %cst_7 {dimension_numbers = #tpu.dot_dimension_numbers<[1], [0], [0], [1], [0, 0, 1, 1], [], []>} : vector<32x8xbf16>, vector<8x8xbf16>, vector<32x8xf32> -> vector<32x8xf32>
    %c2 = arith.constant 2 : index
    %c0_8 = arith.constant 0 : index
    %c0_9 = arith.constant 0 : index
    %9 = vector.load %arg2[%c2, %c0_8, %c0_9] : memref<3x8x8xbf16, #tpu.memory_space<vmem>>, vector<1x8x8xbf16>
    %10 = vector.shape_cast %9 : vector<1x8x8xbf16> to vector<8x8xbf16>
    %cst_10 = arith.constant dense<0.000000e+00> : vector<32x8xf32>
    %11 = tpu.matmul %2, %10, %cst_10 {dimension_numbers = #tpu.dot_dimension_numbers<[1], [0], [0], [1], [0, 0, 1, 1], [], []>} : vector<32x8xbf16>, vector<8x8xbf16>, vector<32x8xf32> -> vector<32x8xf32>
    %12 = vector.shape_cast %5 : vector<32x8xf32> to vector<4x8x8xf32>
    %13 = arith.truncf %12 : vector<4x8x8xf32> to vector<4x8x8xbf16>
    %14 = vector.shape_cast %8 : vector<32x8xf32> to vector<4x8x8xf32>
    %15 = arith.truncf %14 : vector<4x8x8xf32> to vector<4x8x8xbf16>
    %16 = vector.shape_cast %11 : vector<32x8xf32> to vector<4x8x8xf32>
    %17 = arith.truncf %16 : vector<4x8x8xf32> to vector<4x8x8xbf16>
    "tpu.trace_start"() <{level = 10 : i32, message = "hqs,hks->hqk"}> : () -> ()
    %cst_11 = arith.constant dense<0.000000e+00> : vector<4x8x8xf32>
    %18 = tpu.matmul %13, %15, %cst_11 {dimension_numbers = #tpu.dot_dimension_numbers<[2], [2], [1], [1], [0, 0, 0, 1, 1, 1], [0], [0]>} : vector<4x8x8xbf16>, vector<4x8x8xbf16>, vector<4x8x8xf32> -> vector<4x8x8xf32>
    "tpu.trace_stop"() : () -> ()
    %cst_12 = arith.constant dense<0xFF800000> : vector<4x8xf32>
    %19 = vector.multi_reduction <maximumf>, %18, %cst_12 [2] : vector<4x8x8xf32> to vector<4x8xf32>
    %20 = vector.shape_cast %19 : vector<4x8xf32> to vector<4x8x1xf32>
    %21 = vector.broadcast %20 : vector<4x8x1xf32> to vector<4x8x8xf32>
    %22 = arith.subf %18, %21 : vector<4x8x8xf32>
    %23 = math.exp %22 : vector<4x8x8xf32>
    %cst_13 = arith.constant dense<0.000000e+00> : vector<4x8xf32>
    %24 = vector.multi_reduction <add>, %23, %cst_13 [2] : vector<4x8x8xf32> to vector<4x8xf32>
    %25 = vector.shape_cast %24 : vector<4x8xf32> to vector<4x8x1xf32>
    %26 = tpu.reciprocal %25 {approx = true} : vector<4x8x1xf32> -> vector<4x8x1xf32>
    %27 = vector.broadcast %26 : vector<4x8x1xf32> to vector<4x8x8xf32>
    %28 = arith.mulf %23, %27 : vector<4x8x8xf32>
    %29 = arith.truncf %28 : vector<4x8x8xf32> to vector<4x8x8xbf16>
    "tpu.trace_start"() <{level = 10 : i32, message = "hqk,hks->hqs"}> : () -> ()
    %cst_14 = arith.constant dense<0.000000e+00> : vector<4x8x8xf32>
    %30 = tpu.matmul %29, %17, %cst_14 {dimension_numbers = #tpu.dot_dimension_numbers<[2], [1], [1], [2], [0, 0, 0, 1, 1, 2], [0], [0]>} : vector<4x8x8xbf16>, vector<4x8x8xbf16>, vector<4x8x8xf32> -> vector<4x8x8xf32>
    "tpu.trace_stop"() : () -> ()
    %31 = vector.extract_strided_slice %30 {offsets = [0, 0, 0], sizes = [1, 8, 8], strides = [1, 1, 1]} : vector<4x8x8xf32> to vector<1x8x8xf32>
    %32 = vector.shape_cast %31 : vector<1x8x8xf32> to vector<8x8xf32>
    %33 = vector.extract_strided_slice %30 {offsets = [1, 0, 0], sizes = [1, 8, 8], strides = [1, 1, 1]} : vector<4x8x8xf32> to vector<1x8x8xf32>
    %34 = vector.shape_cast %33 : vector<1x8x8xf32> to vector<8x8xf32>
    %35 = vector.extract_strided_slice %30 {offsets = [2, 0, 0], sizes = [1, 8, 8], strides = [1, 1, 1]} : vector<4x8x8xf32> to vector<1x8x8xf32>
    %36 = vector.shape_cast %35 : vector<1x8x8xf32> to vector<8x8xf32>
    %37 = vector.extract_strided_slice %30 {offsets = [3, 0, 0], sizes = [1, 8, 8], strides = [1, 1, 1]} : vector<4x8x8xf32> to vector<1x8x8xf32>
    %38 = vector.shape_cast %37 : vector<1x8x8xf32> to vector<8x8xf32>
    %39 = tpu.concatenate %32, %34, %36, %38 in 1 : vector<8x8xf32>, vector<8x8xf32>, vector<8x8xf32>, vector<8x8xf32> -> vector<8x32xf32>
    %40 = arith.truncf %39 : vector<8x32xf32> to vector<8x32xbf16>
    %c0_15 = arith.constant 0 : index
    %c0_16 = arith.constant 0 : index
    %41 = vector.load %arg3[%c0_15, %c0_16] : memref<32x32xbf16, #tpu.memory_space<vmem>>, vector<32x32xbf16>
    %cst_17 = arith.constant dense<0.000000e+00> : vector<8x32xf32>
    %42 = tpu.matmul %40, %41, %cst_17 {dimension_numbers = #tpu.dot_dimension_numbers<[1], [0], [0], [1], [0, 0, 1, 1], [], []>} : vector<8x32xbf16>, vector<32x32xbf16>, vector<8x32xf32> -> vector<8x32xf32>
    %c0_18 = arith.constant 0 : index
    %c0_19 = arith.constant 0 : index
    %43 = vector.load %arg4[%c0_18, %c0_19] : memref<1x32xf32, #tpu.memory_space<vmem>>, vector<1x32xf32>
    %44 = vector.broadcast %43 : vector<1x32xf32> to vector<8x32xf32>
    %45 = arith.addf %42, %44 : vector<8x32xf32>
    %c0_20 = arith.constant 0 : index
    %c0_21 = arith.constant 0 : index
    %c0_22 = arith.constant 0 : index
    %46 = vector.load %arg5[%c0_20, %c0_21, %c0_22] : memref<1x8x32xf32, #tpu.memory_space<vmem>>, vector<1x8x32xf32>
    %47 = vector.shape_cast %46 : vector<1x8x32xf32> to vector<8x32xf32>
    %48 = vector.shape_cast %45 : vector<8x32xf32> to vector<1x8x32xf32>
    tpu.vector_store %arg5[%c0_20, %c0_21, %c0_22], %48 {strides = array<i32>} : memref<1x8x32xf32, #tpu.memory_space<vmem>>, vector<1x8x32xf32>,
    return
  }
  func.func @transform_0(%arg0: i32) -> (i32, i32, i32) {
    %c0_i32 = arith.constant 0 : i32
    %c0_i32_0 = arith.constant 0 : i32
    %c0_i32_1 = arith.constant 0 : i32
    return %arg0, %c0_i32, %c0_i32_0 : i32, i32, i32
  }
  func.func @transform_1(%arg0: i32) -> (i32, i32, i32) {
    %c0_i32 = arith.constant 0 : i32
    %c0_i32_0 = arith.constant 0 : i32
    %c0_i32_1 = arith.constant 0 : i32
    %c0_i32_2 = arith.constant 0 : i32
    return %c0_i32, %c0_i32_0, %c0_i32_1 : i32, i32, i32
  }
  func.func @transform_2(%arg0: i32) -> (i32, i32) {
    %c0_i32 = arith.constant 0 : i32
    %c0_i32_0 = arith.constant 0 : i32
    %c0_i32_1 = arith.constant 0 : i32
    return %c0_i32, %c0_i32_0 : i32, i32
  }
  func.func @transform_3(%arg0: i32) -> (i32, i32) {
    %c0_i32 = arith.constant 0 : i32
    %c0_i32_0 = arith.constant 0 : i32
    %c0_i32_1 = arith.constant 0 : i32
    return %c0_i32, %c0_i32_0 : i32, i32
  }
  func.func @transform_4(%arg0: i32) -> (i32, i32, i32) {
    %c0_i32 = arith.constant 0 : i32
    %c0_i32_0 = arith.constant 0 : i32
    %c0_i32_1 = arith.constant 0 : i32
    return %arg0, %c0_i32, %c0_i32_0 : i32, i32, i32
  }
}

</mosaic_0001>

<llo_original>
// kernel: self_attention_narrow.1
$region0: #{self_attention_narrow.1}
  #allocation0 [shape = 'u32[]', space=smem, size = 0x4, offset = 0x4, fixed_abs, tag = 'smem constant byte address 0x4 - core index']
  #allocation1 [shape = 'u32[144,128]{1,0:T(1,128)}', space=vmem, size = 0x12000, scoped, tag = 'internal scratch']
  %s0 = inlined_call_operand.vmem [shape: f32[2,32,8], index: 0, kind: input, shape index: {}]
  %s1 = inlined_call_operand.vmem [shape: bf16[3,8,8], index: 1, kind: input, shape index: {}]
  %s2 = inlined_call_operand.vmem [shape: bf16[32,32], index: 2, kind: input, shape index: {}]
  %s3 = inlined_call_operand.vmem [shape: f32[1,32], index: 3, kind: input, shape index: {}]
  %s4 = inlined_call_operand.hbm [shape: f32[2,8,32], index: 4, kind: output, shape index: {}]
  %s5 = sld [smem:[#allocation0]]
  $region49: #{self_attention_narrow.1} parent=0
    _
  %s7 = ssub.s32 1, %s5
  %s8 = scalar_select 0, %s7, %s5
  $region1: #{self_attention_narrow.1} parent=0
    #allocation2 [shape = 'u8[8192]{0}', space=vmem, size = 0x2000, scoped, tag = 'output window, operand 0']
    #allocation3 [shape = 's32[2]{0}', space=sflag, size = 0x8, scoped, tag = 'scoped memory for self_attention_narrow.1']
    %9 = vsyncpa [#allocation3], 0
    %s10 = scalar_lea.sflag [#allocation3], 1
    %11 = vsyncpa %s10, 0
    loop: start=0, step=1, limit=4
    $region2: #{self_attention_narrow.1} parent=1 // loop_pre_header
      _
    $region3: #{self_attention_narrow.1} parent=1 // loop_header
      %s13 = sphi 0, %s17
      %p14 = scmp.ge.s32.totalorder %s13, 4
      %s23 = sphi 0, %s25
      %s26 = sphi 0, %s23
      %s27 = sphi 0, %s26
      %s43 = sphi 0, %s27
      %s47 = sphi 0, %s47
      %s49 = sphi 0, %s47
      %s50 = sphi 0, %s49
      %s64 = sphi 0, %s50
      %s68 = sphi 0, %s68
      %s70 = sphi 0, %s68
      %s71 = sphi 0, %s70
      %s85 = sphi 0, %s71
      %s89 = sphi 0, %s89
      %s91 = sphi 0, %s89
      %s92 = sphi 0, %s91
      %s106 = sphi 0, %s92
      %s112 = sphi 0, %s114
      %s115 = sphi 0, %s112
      %s116 = sphi 0, %s115
      %s132 = sphi 0, %s116
    $region4: #{self_attention_narrow.1} parent=1 // loop_header_branch
      %16 = sbr.rel (%p14) target = $region8
    $region5: #{self_attention_narrow.1} parent=1 // loop_body
      %s18 = ssub.s32 %s13, 1
      %s19 = ssub.s32 %s13, 2
      %s20 = sadd.s32 %s13, 1
      %s21 = ssub.s32 %s13, %s20
      %p22 = scmp.eq.s32.totalorder %s21, 0
      %s24 = sadd.s32 %s23, 1
      %s25 = scalar_select %p22, %s23, %s24
      %p28 = pneg %p22
      %p29 = scmp.eq.s32.totalorder %s13, 1
      %p30 = por %p28, %p29
      %p31 = scmp.ne.s32.totalorder %s23, %s26
      %p32 = scmp.eq.s32.totalorder %s13, 0
      %p33 = por %p31, %p32
      %p34 = scmp.ne.s32.totalorder %s23, %s26
      %p35 = scmp.eq.s32.totalorder %s18, 1
      %p36 = por %p34, %p35
      %p37 = scmp.ne.s32.totalorder %s26, %s27
      %p38 = scmp.eq.s32.totalorder %s18, 0
      %p39 = por %p37, %p38
      %p40 = scmp.ne.s32.totalorder %s26, %s27
      %p41 = scmp.eq.s32.totalorder %s19, 1
      %p42 = por %p40, %p41
      %p44 = scmp.ne.s32.totalorder %s27, %s43
      %p45 = scmp.eq.s32.totalorder %s19, 0
      %p46 = por %p44, %p45
      %s48 = sadd.s32 %s47, 1
      %p51 = scmp.eq.s32.totalorder %s13, 1
      %p52 = scmp.ne.s32.totalorder %s47, %s49
      %p53 = scmp.eq.s32.totalorder %s13, 0
      %p54 = por %p52, %p53
      %p55 = scmp.ne.s32.totalorder %s47, %s49
      %p56 = scmp.eq.s32.totalorder %s18, 1
      %p57 = por %p55, %p56
      %p58 = scmp.ne.s32.totalorder %s49, %s50
      %p59 = scmp.eq.s32.totalorder %s18, 0
      %p60 = por %p58, %p59
      %p61 = scmp.ne.s32.totalorder %s49, %s50
      %p62 = scmp.eq.s32.totalorder %s19, 1
      %p63 = por %p61, %p62
      %p65 = scmp.ne.s32.totalorder %s50, %s64
      %p66 = scmp.eq.s32.totalorder %s19, 0
      %p67 = por %p65, %p66
      %s69 = sadd.s32 %s68, 1
      %p72 = scmp.eq.s32.totalorder %s13, 1
      %p73 = scmp.ne.s32.totalorder %s68, %s70
      %p74 = scmp.eq.s32.totalorder %s13, 0
      %p75 = por %p73, %p74
      %p76 = scmp.ne.s32.totalorder %s68, %s70
      %p77 = scmp.eq.s32.totalorder %s18, 1
      %p78 = por %p76, %p77
      %p79 = scmp.ne.s32.totalorder %s70, %s71
      %p80 = scmp.eq.s32.totalorder %s18, 0
      %p81 = por %p79, %p80
      %p82 = scmp.ne.s32.totalorder %s70, %s71
      %p83 = scmp.eq.s32.totalorder %s19, 1
      %p84 = por %p82, %p83
      %p86 = scmp.ne.s32.totalorder %s71, %s85
      %p87 = scmp.eq.s32.totalorder %s19, 0
      %p88 = por %p86, %p87
      %s90 = sadd.s32 %s89, 1
      %p93 = scmp.eq.s32.totalorder %s13, 1
      %p94 = scmp.ne.s32.totalorder %s89, %s91
      %p95 = scmp.eq.s32.totalorder %s13, 0
      %p96 = por %p94, %p95
      %p97 = scmp.ne.s32.totalorder %s89, %s91
      %p98 = scmp.eq.s32.totalorder %s18, 1
      %p99 = por %p97, %p98
      %p100 = scmp.ne.s32.totalorder %s91, %s92
      %p101 = scmp.eq.s32.totalorder %s18, 0
      %p102 = por %p100, %p101
      %p103 = scmp.ne.s32.totalorder %s91, %s92
      %p104 = scmp.eq.s32.totalorder %s19, 1
      %p105 = por %p103, %p104
      %p107 = scmp.ne.s32.totalorder %s92, %s106
      %p108 = scmp.eq.s32.totalorder %s19, 0
      %p109 = por %p107, %p108
      %s110 = ssub.s32 %s13, %s20
      %p111 = scmp.eq.s32.totalorder %s110, 0
      %s113 = sadd.s32 %s112, 1
      %s114 = scalar_select %p111, %s112, %s113
      %p117 = pneg %p111
      %p118 = scmp.eq.s32.totalorder %s13, 1
      %p119 = por %p117, %p118
      %p120 = scmp.ne.s32.totalorder %s112, %s115
      %p121 = scmp.eq.s32.totalorder %s13, 0
      %p122 = por %p120, %p121
      %p123 = scmp.ne.s32.totalorder %s112, %s115
      %p124 = scmp.eq.s32.totalorder %s18, 1
      %p125 = por %p123, %p124
      %p126 = scmp.ne.s32.totalorder %s115, %s116
      %p127 = scmp.eq.s32.totalorder %s18, 0
      %p128 = por %p126, %p127
      %p129 = scmp.ne.s32.totalorder %s115, %s116
      %p130 = scmp.eq.s32.totalorder %s19, 1
      %p131 = por %p129, %p130
      %p133 = scmp.ne.s32.totalorder %s116, %s132
      %p134 = scmp.eq.s32.totalorder %s19, 0
      %p135 = por %p133, %p134
      %p136 = scmp.le.s32.totalorder 1, %s13
      %p137 = scmp.lt.s32.totalorder %s13, 3
      %p138 = pnand %p136, %p137
      %p139 = pneg %p138
      // Predicated region
      $region9: #{self_attention_narrow.1} parent=5 // pred_check
        _
      $region10: #{self_attention_narrow.1} parent=5 // pred_check_branch
        %141 = sbr.rel (%p138) target = $region12
      $region11: #{self_attention_narrow.1} parent=5 // pred_region
        %s142 = ssub.s32 %s13, 1
        // Predicated region
        $region13: #{self_attention_narrow.1} parent=11 // pred_check
          %p143 = pneg %p60
        $region14: #{self_attention_narrow.1} parent=11 // pred_check_branch
          %145 = sbr.rel (%p143) target = $region16
        $region15: #{self_attention_narrow.1} parent=11 // pred_region
          _
        $region16: #{self_attention_narrow.1} parent=11 // pred_fallthru
          _
        // Predicated region
        $region17: #{self_attention_narrow.1} parent=11 // pred_check
          %p146 = pneg %p81
        $region18: #{self_attention_narrow.1} parent=11 // pred_check_branch
          %148 = sbr.rel (%p146) target = $region20
        $region19: #{self_attention_narrow.1} parent=11 // pred_region
          _
        $region20: #{self_attention_narrow.1} parent=11 // pred_fallthru
          _
        // Predicated region
        $region21: #{self_attention_narrow.1} parent=11 // pred_check
          %p149 = pneg %p102
        $region22: #{self_attention_narrow.1} parent=11 // pred_check_branch
          %151 = sbr.rel (%p149) target = $region24
        $region23: #{self_attention_narrow.1} parent=11 // pred_region
          _
        $region24: #{self_attention_narrow.1} parent=11 // pred_fallthru
          _
      $region12: #{self_attention_narrow.1} parent=5 // pred_fallthru
        _
      %p152 = scmp.lt.s32.totalorder %s13, 2
      // Predicated region
      $region25: #{self_attention_narrow.1} parent=5 // pred_check
        %p153 = pneg %p152
      $region26: #{self_attention_narrow.1} parent=5 // pred_check_branch
        %155 = sbr.rel (%p153) target = $region28
      $region27: #{self_attention_narrow.1} parent=5 // pred_region
        // Predicated region
        $region29: #{self_attention_narrow.1} parent=27 // pred_check
          %p156 = pneg %p33
        $region30: #{self_attention_narrow.1} parent=27 // pred_check_branch
          %158 = sbr.rel (%p156) target = $region32
        $region31: #{self_attention_narrow.1} parent=27 // pred_region
          %p159 = scmp.lt.s32.totalorder %s13, 1
          %s160 = scalar_select %p159, %s13, 1
          %s161 = smul.addr %s160, 4
          %s162 = smul.addr %s161, 8
          %s163 = scalar_lea.vmem %s0, %s162
        $region32: #{self_attention_narrow.1} parent=27 // pred_fallthru
          _
      $region28: #{self_attention_narrow.1} parent=5 // pred_fallthru
        _
      %p164 = scmp.le.s32.totalorder 1, %s13
      %p165 = scmp.lt.s32.totalorder %s13, 3
      %p166 = pnand %p164, %p165
      %p167 = pneg %p166
      // Predicated region
      $region33: #{self_attention_narrow.1} parent=5 // pred_check
        _
      $region34: #{self_attention_narrow.1} parent=5 // pred_check_branch
        %169 = sbr.rel (%p166) target = $region36
      $region35: #{self_attention_narrow.1} parent=5 // pred_region
        %s170 = ssub.s32 %s13, 1
        %p171 = scmp.lt.s32.totalorder %s18, 1
        %s172 = scalar_select %p171, %s18, 1
        %s173 = smul.addr %s172, 4
        %s174 = smul.addr %s173, 8
        %s175 = scalar_lea.vmem %s0, %s174
        %p176 = pneg %p39
        %p177 = pneg %p36
        %p178 = pneg %p60
        %p179 = pneg %p57
        %p180 = pneg %p81
        %p181 = pneg %p78
        %p182 = pneg %p102
        %p183 = pneg %p99
        %p184 = pneg %p128
        %p185 = pneg %p125
        %s186 = sand.u32 %s115, 1
        %s187 = scalar_lea.sflag [#allocation3], %s186
        %s188 = sand.u32 %s115, 1
        %s189 = smul.addr %s188, 8
        %s190 = scalar_lea.vmem [#allocation2], %s189
        %p191 = scmp.lt.s32.totalorder %s18, 1
        %s192 = scalar_select %p191, %s18, 1
        %s193 = smul.addr %s192, 4
        %s194 = smul.addr %s193, 8
        %s195 = scalar_lea.vmem %s0, %s194
        %v197 = vld [vmem:[%s195] sm:$0xff]
        %v198 = vld [vmem:[%s195 + $0x8] sm:$0xff]
        %v199 = vld [vmem:[%s195 + $0x10] sm:$0xff]
        %v200 = vld [vmem:[%s195 + $0x18] sm:$0xff]
        %v201 = vpack.c.bf16 %v198, %v197
        %v202 = vpack.c.bf16 %v200, %v199
        %v203 = vld [vmem:[%s1] sm:$0xf]
        %vm204 = vcmask 64512
        %v206 = vsel %vm204, %v201, 0
        %v209 = vsel %vm204, %v202, 0
        %vm211 = vcmask 1043456
        %v213 = vsel %vm211, %v203, 0
        %215 = vmatprep.subr.bf16.mxu0 0
        %216 = vmatpush1.bf16.msra.mxu0 %v213
        %217 = vmatprep.subr.bf16.mxu0 0
        %218 = vmatpush1.bf16.msra.mxu0 0
        %219 = vmatprep.subr.bf16.mxu0 0
        %220 = vmatpush1.bf16.msra.mxu0 0
        %221 = vmatprep.subr.bf16.mxu0 0
        %222 = vmatpush1.bf16.msra.mxu0 0
        %223 = vmatprep.subr.bf16.mxu0 0
        %224 = vmatpush1.bf16.msra.mxu0 0
        %225 = vmatprep.subr.bf16.mxu0 0
        %226 = vmatpush1.bf16.msra.mxu0 0
        %227 = vmatprep.subr.bf16.mxu0 0
        %228 = vmatpush1.bf16.msra.mxu0 0
        %229 = vmatprep.subr.bf16.mxu0 0
        %230 = vmatpush1.bf16.msra.mxu0 0
        %231 = vmatprep.subr.bf16.mxu0 0
        %232 = vmatpush1.bf16.msra.mxu0 0
        %233 = vmatprep.subr.bf16.mxu0 0
        %234 = vmatpush1.bf16.msra.mxu0 0
        %235 = vmatprep.subr.bf16.mxu0 0
        %236 = vmatpush1.bf16.msra.mxu0 0
        %237 = vmatprep.subr.bf16.mxu0 0
        %238 = vmatpush1.bf16.msra.mxu0 0
        %239 = vmatprep.subr.bf16.mxu0 0
        %240 = vmatpush1.bf16.msra.mxu0 0
        %241 = vmatprep.subr.bf16.mxu0 0
        %242 = vmatpush1.bf16.msra.mxu0 0
        %243 = vmatprep.subr.bf16.mxu0 0
        %244 = vmatpush1.bf16.msra.mxu0 0
        %245 = vmatprep.subr.bf16.mxu0 0
        %246 = vmatpush1.bf16.msra.mxu0 0
        %247 = vmatprep.mubr.bf16.mxu0 0
        %248 = vmatmul.mubr.bf16.gmra.mrb[0].mxu0 %v206
        %v249 = vpop.f32.mrb[0].mxu0
        %v250 = vadd.f32 0.0, %v249
        %v251 = vpop.f32.mrb[0].mxu0
        %v252 = vpop.f32.mrb[0].mxu0
        %v253 = vadd.f32 0.0, %v252
        %v254 = vpop.f32.mrb[0].mxu0
        %255 = vmatprep.mubr.bf16.mxu0 0
        %256 = vmatmul.mubr.bf16.gmra.mrb[0].mxu0 %v209
        %v257 = vpop.f32.mrb[0].mxu0
        %v258 = vadd.f32 0.0, %v257
        %v259 = vpop.f32.mrb[0].mxu0
        %v260 = vpop.f32.mrb[0].mxu0
        %v261 = vadd.f32 0.0, %v260
        %v262 = vpop.f32.mrb[0].mxu0
        %263 = vdwg.mxu0
        %s264 = scalar_lea.vmem %s1, 4
        %v265 = vld [vmem:[%s264] sm:$0xf]
        %v267 = vsel %vm211, %v265, 0
        %269 = vmatprep.subr.bf16.mxu0 0
        %270 = vmatpush1.bf16.msra.mxu0 %v267
        %271 = vmatprep.subr.bf16.mxu0 0
        %272 = vmatpush1.bf16.msra.mxu0 0
        %273 = vmatprep.subr.bf16.mxu0 0
        %274 = vmatpush1.bf16.msra.mxu0 0
        %275 = vmatprep.subr.bf16.mxu0 0
        %276 = vmatpush1.bf16.msra.mxu0 0
        %277 = vmatprep.subr.bf16.mxu0 0
        %278 = vmatpush1.bf16.msra.mxu0 0
        %279 = vmatprep.subr.bf16.mxu0 0
        %280 = vmatpush1.bf16.msra.mxu0 0
        %281 = vmatprep.subr.bf16.mxu0 0
        %282 = vmatpush1.bf16.msra.mxu0 0
        %283 = vmatprep.subr.bf16.mxu0 0
        %284 = vmatpush1.bf16.msra.mxu0 0
        %285 = vmatprep.subr.bf16.mxu0 0
        %286 = vmatpush1.bf16.msra.mxu0 0
        %287 = vmatprep.subr.bf16.mxu0 0
        %288 = vmatpush1.bf16.msra.mxu0 0
        %289 = vmatprep.subr.bf16.mxu0 0
        %290 = vmatpush1.bf16.msra.mxu0 0
        %291 = vmatprep.subr.bf16.mxu0 0
        %292 = vmatpush1.bf16.msra.mxu0 0
        %293 = vmatprep.subr.bf16.mxu0 0
        %294 = vmatpush1.bf16.msra.mxu0 0
        %295 = vmatprep.subr.bf16.mxu0 0
        %296 = vmatpush1.bf16.msra.mxu0 0
        %297 = vmatprep.subr.bf16.mxu0 0
        %298 = vmatpush1.bf16.msra.mxu0 0
        %299 = vmatprep.subr.bf16.mxu0 0
        %300 = vmatpush1.bf16.msra.mxu0 0
        %301 = vmatprep.mubr.bf16.mxu0 0
        %302 = vmatmul.mubr.bf16.gmra.mrb[0].mxu0 %v206
        %v303 = vpop.f32.mrb[0].mxu0
        %v304 = vadd.f32 0.0, %v303
        %v305 = vpop.f32.mrb[0].mxu0
        %v306 = vpop.f32.mrb[0].mxu0
        %v307 = vadd.f32 0.0, %v306
        %v308 = vpop.f32.mrb[0].mxu0
        %309 = vmatprep.mubr.bf16.mxu0 0
        %310 = vmatmul.mubr.bf16.gmra.mrb[0].mxu0 %v209
        %v311 = vpop.f32.mrb[0].mxu0
        %v312 = vadd.f32 0.0, %v311
        %v313 = vpop.f32.mrb[0].mxu0
        %v314 = vpop.f32.mrb[0].mxu0
        %v315 = vadd.f32 0.0, %v314
        %v316 = vpop.f32.mrb[0].mxu0
        %317 = vdwg.mxu0
        %s318 = scalar_lea.vmem %s1, 8
        %v319 = vld [vmem:[%s318] sm:$0xf]
        %v321 = vsel %vm211, %v319, 0
        %323 = vmatprep.subr.bf16.mxu0 0
        %324 = vmatpush1.bf16.msra.mxu0 %v321
        %325 = vmatprep.subr.bf16.mxu0 0
        %326 = vmatpush1.bf16.msra.mxu0 0
        %327 = vmatprep.subr.bf16.mxu0 0
        %328 = vmatpush1.bf16.msra.mxu0 0
        %329 = vmatprep.subr.bf16.mxu0 0
        %330 = vmatpush1.bf16.msra.mxu0 0
        %331 = vmatprep.subr.bf16.mxu0 0
        %332 = vmatpush1.bf16.msra.mxu0 0
        %333 = vmatprep.subr.bf16.mxu0 0
        %334 = vmatpush1.bf16.msra.mxu0 0
        %335 = vmatprep.subr.bf16.mxu0 0
        %336 = vmatpush1.bf16.msra.mxu0 0
        %337 = vmatprep.subr.bf16.mxu0 0
        %338 = vmatpush1.bf16.msra.mxu0 0
        %339 = vmatprep.subr.bf16.mxu0 0
        %340 = vmatpush1.bf16.msra.mxu0 0
        %341 = vmatprep.subr.bf16.mxu0 0
        %342 = vmatpush1.bf16.msra.mxu0 0
        %343 = vmatprep.subr.bf16.mxu0 0
        %344 = vmatpush1.bf16.msra.mxu0 0
        %345 = vmatprep.subr.bf16.mxu0 0
        %346 = vmatpush1.bf16.msra.mxu0 0
        %347 = vmatprep.subr.bf16.mxu0 0
        %348 = vmatpush1.bf16.msra.mxu0 0
        %349 = vmatprep.subr.bf16.mxu0 0
        %350 = vmatpush1.bf16.msra.mxu0 0
        %351 = vmatprep.subr.bf16.mxu0 0
        %352 = vmatpush1.bf16.msra.mxu0 0
        %353 = vmatprep.subr.bf16.mxu0 0
        %354 = vmatpush1.bf16.msra.mxu0 0
        %355 = vmatprep.mubr.bf16.mxu0 0
        %356 = vmatmul.mubr.bf16.gmra.mrb[0].mxu0 %v206
        %v357 = vpop.f32.mrb[0].mxu0
        %v358 = vadd.f32 0.0, %v357
        %v359 = vpop.f32.mrb[0].mxu0
        %v360 = vpop.f32.mrb[0].mxu0
        %v361 = vadd.f32 0.0, %v360
        %v362 = vpop.f32.mrb[0].mxu0
        %363 = vmatprep.mubr.bf16.mxu0 0
        %364 = vmatmul.mubr.bf16.gmra.mrb[0].mxu0 %v209
        %v365 = vpop.f32.mrb[0].mxu0
        %v366 = vadd.f32 0.0, %v365
        %v367 = vpop.f32.mrb[0].mxu0
        %v368 = vpop.f32.mrb[0].mxu0
        %v369 = vadd.f32 0.0, %v368
        %v370 = vpop.f32.mrb[0].mxu0
        %371 = vdwg.mxu0
        %v372 = vpack.c.bf16 %v250, %v250
        %v373 = vpack.c.bf16 %v253, %v253
        %v374 = vpack.c.bf16 %v258, %v258
        %v375 = vpack.c.bf16 %v261, %v261
        %v376 = vpack.c.bf16 %v304, %v304
        %v377 = vpack.c.bf16 %v307, %v307
        %v378 = vpack.c.bf16 %v312, %v312
        %v379 = vpack.c.bf16 %v315, %v315
        %v380 = vpack.c.bf16 %v358, %v358
        %v381 = vpack.c.bf16 %v361, %v361
        %v382 = vpack.c.bf16 %v366, %v366
        %v383 = vpack.c.bf16 %v369, %v369
        %v385 = vsel %vm204, %v372, 0
        %v388 = vsel %vm204, %v376, 0
        %390 = vmatprep.subr.bf16.mxu0 0
        %391 = vmatpush1.bf16.xpose.msra.mxu0 %v388
        %392 = vmatprep.subr.bf16.mxu0 0
        %393 = vmatpush1.bf16.xpose.msra.mxu0 0
        %394 = vmatprep.subr.bf16.mxu0 0
        %395 = vmatpush1.bf16.xpose.msra.mxu0 0
        %396 = vmatprep.subr.bf16.mxu0 0
        %397 = vmatpush1.bf16.xpose.msra.mxu0 0
        %398 = vmatprep.subr.bf16.mxu0 0
        %399 = vmatpush1.bf16.xpose.msra.mxu0 0
        %400 = vmatprep.subr.bf16.mxu0 0
        %401 = vmatpush1.bf16.xpose.msra.mxu0 0
        %402 = vmatprep.subr.bf16.mxu0 0
        %403 = vmatpush1.bf16.xpose.msra.mxu0 0
        %404 = vmatprep.subr.bf16.mxu0 0
        %405 = vmatpush1.bf16.xpose.msra.mxu0 0
        %406 = vmatprep.subr.bf16.mxu0 0
        %407 = vmatpush1.bf16.xpose.msra.mxu0 0
        %408 = vmatprep.subr.bf16.mxu0 0
        %409 = vmatpush1.bf16.xpose.msra.mxu0 0
        %410 = vmatprep.subr.bf16.mxu0 0
        %411 = vmatpush1.bf16.xpose.msra.mxu0 0
        %412 = vmatprep.subr.bf16.mxu0 0
        %413 = vmatpush1.bf16.xpose.msra.mxu0 0
        %414 = vmatprep.subr.bf16.mxu0 0
        %415 = vmatpush1.bf16.xpose.msra.mxu0 0
        %416 = vmatprep.subr.bf16.mxu0 0
        %417 = vmatpush1.bf16.xpose.msra.mxu0 0
        %418 = vmatprep.subr.bf16.mxu0 0
        %419 = vmatpush1.bf16.xpose.msra.mxu0 0
        %420 = vmatprep.subr.bf16.mxu0 0
        %421 = vmatpush1.bf16.xpose.msra.mxu0 0
        %422 = vmatprep.mubr.bf16.mxu0 0
        %423 = vmatmul.mubr.bf16.gmra.mrb[0].mxu0 %v385
        %v424 = vpop.f32.mrb[0].mxu0
        %v425 = vadd.f32 0.0, %v424
        %v426 = vpop.f32.mrb[0].mxu0
        %v427 = vpop.f32.mrb[0].mxu0
        %v428 = vpop.f32.mrb[0].mxu0
        %429 = vdwg.mxu0
        %v431 = vsel %vm204, %v373, 0
        %v434 = vsel %vm204, %v377, 0
        %436 = vmatprep.subr.bf16.mxu0 0
        %437 = vmatpush1.bf16.xpose.msra.mxu0 %v434
        %438 = vmatprep.subr.bf16.mxu0 0
        %439 = vmatpush1.bf16.xpose.msra.mxu0 0
        %440 = vmatprep.subr.bf16.mxu0 0
        %441 = vmatpush1.bf16.xpose.msra.mxu0 0
        %442 = vmatprep.subr.bf16.mxu0 0
        %443 = vmatpush1.bf16.xpose.msra.mxu0 0
        %444 = vmatprep.subr.bf16.mxu0 0
        %445 = vmatpush1.bf16.xpose.msra.mxu0 0
        %446 = vmatprep.subr.bf16.mxu0 0
        %447 = vmatpush1.bf16.xpose.msra.mxu0 0
        %448 = vmatprep.subr.bf16.mxu0 0
        %449 = vmatpush1.bf16.xpose.msra.mxu0 0
        %450 = vmatprep.subr.bf16.mxu0 0
        %451 = vmatpush1.bf16.xpose.msra.mxu0 0
        %452 = vmatprep.subr.bf16.mxu0 0
        %453 = vmatpush1.bf16.xpose.msra.mxu0 0
        %454 = vmatprep.subr.bf16.mxu0 0
        %455 = vmatpush1.bf16.xpose.msra.mxu0 0
        %456 = vmatprep.subr.bf16.mxu0 0
        %457 = vmatpush1.bf16.xpose.msra.mxu0 0
        %458 = vmatprep.subr.bf16.mxu0 0
        %459 = vmatpush1.bf16.xpose.msra.mxu0 0
        %460 = vmatprep.subr.bf16.mxu0 0
        %461 = vmatpush1.bf16.xpose.msra.mxu0 0
        %462 = vmatprep.subr.bf16.mxu0 0
        %463 = vmatpush1.bf16.xpose.msra.mxu0 0
        %464 = vmatprep.subr.bf16.mxu0 0
        %465 = vmatpush1.bf16.xpose.msra.mxu0 0
        %466 = vmatprep.subr.bf16.mxu0 0
        %467 = vmatpush1.bf16.xpose.msra.mxu0 0
        %468 = vmatprep.mubr.bf16.mxu0 0
        %469 = vmatmul.mubr.bf16.gmra.mrb[0].mxu0 %v431
        %v470 = vpop.f32.mrb[0].mxu0
        %v471 = vadd.f32 0.0, %v470
        %v472 = vpop.f32.mrb[0].mxu0
        %v473 = vpop.f32.mrb[0].mxu0
        %v474 = vpop.f32.mrb[0].mxu0
        %475 = vdwg.mxu0
        %v477 = vsel %vm204, %v374, 0
        %v480 = vsel %vm204, %v378, 0
        %482 = vmatprep.subr.bf16.mxu0 0
        %483 = vmatpush1.bf16.xpose.msra.mxu0 %v480
        %484 = vmatprep.subr.bf16.mxu0 0
        %485 = vmatpush1.bf16.xpose.msra.mxu0 0
        %486 = vmatprep.subr.bf16.mxu0 0
        %487 = vmatpush1.bf16.xpose.msra.mxu0 0
        %488 = vmatprep.subr.bf16.mxu0 0
        %489 = vmatpush1.bf16.xpose.msra.mxu0 0
        %490 = vmatprep.subr.bf16.mxu0 0
        %491 = vmatpush1.bf16.xpose.msra.mxu0 0
        %492 = vmatprep.subr.bf16.mxu0 0
        %493 = vmatpush1.bf16.xpose.msra.mxu0 0
        %494 = vmatprep.subr.bf16.mxu0 0
        %495 = vmatpush1.bf16.xpose.msra.mxu0 0
        %496 = vmatprep.subr.bf16.mxu0 0
        %497 = vmatpush1.bf16.xpose.msra.mxu0 0
        %498 = vmatprep.subr.bf16.mxu0 0
        %499 = vmatpush1.bf16.xpose.msra.mxu0 0
        %500 = vmatprep.subr.bf16.mxu0 0
        %501 = vmatpush1.bf16.xpose.msra.mxu0 0
        %502 = vmatprep.subr.bf16.mxu0 0
        %503 = vmatpush1.bf16.xpose.msra.mxu0 0
        %504 = vmatprep.subr.bf16.mxu0 0
        %505 = vmatpush1.bf16.xpose.msra.mxu0 0
        %506 = vmatprep.subr.bf16.mxu0 0
        %507 = vmatpush1.bf16.xpose.msra.mxu0 0
        %508 = vmatprep.subr.bf16.mxu0 0
        %509 = vmatpush1.bf16.xpose.msra.mxu0 0
        %510 = vmatprep.subr.bf16.mxu0 0
        %511 = vmatpush1.bf16.xpose.msra.mxu0 0
        %512 = vmatprep.subr.bf16.mxu0 0
        %513 = vmatpush1.bf16.xpose.msra.mxu0 0
        %514 = vmatprep.mubr.bf16.mxu0 0
        %515 = vmatmul.mubr.bf16.gmra.mrb[0].mxu0 %v477
        %v516 = vpop.f32.mrb[0].mxu0
        %v517 = vadd.f32 0.0, %v516
        %v518 = vpop.f32.mrb[0].mxu0
        %v519 = vpop.f32.mrb[0].mxu0
        %v520 = vpop.f32.mrb[0].mxu0
        %521 = vdwg.mxu0
        %v523 = vsel %vm204, %v375, 0
        %v526 = vsel %vm204, %v379, 0
        %528 = vmatprep.subr.bf16.mxu0 0
        %529 = vmatpush1.bf16.xpose.msra.mxu0 %v526
        %530 = vmatprep.subr.bf16.mxu0 0
        %531 = vmatpush1.bf16.xpose.msra.mxu0 0
        %532 = vmatprep.subr.bf16.mxu0 0
        %533 = vmatpush1.bf16.xpose.msra.mxu0 0
        %534 = vmatprep.subr.bf16.mxu0 0
        %535 = vmatpush1.bf16.xpose.msra.mxu0 0
        %536 = vmatprep.subr.bf16.mxu0 0
        %537 = vmatpush1.bf16.xpose.msra.mxu0 0
        %538 = vmatprep.subr.bf16.mxu0 0
        %539 = vmatpush1.bf16.xpose.msra.mxu0 0
        %540 = vmatprep.subr.bf16.mxu0 0
        %541 = vmatpush1.bf16.xpose.msra.mxu0 0
        %542 = vmatprep.subr.bf16.mxu0 0
        %543 = vmatpush1.bf16.xpose.msra.mxu0 0
        %544 = vmatprep.subr.bf16.mxu0 0
        %545 = vmatpush1.bf16.xpose.msra.mxu0 0
        %546 = vmatprep.subr.bf16.mxu0 0
        %547 = vmatpush1.bf16.xpose.msra.mxu0 0
        %548 = vmatprep.subr.bf16.mxu0 0
        %549 = vmatpush1.bf16.xpose.msra.mxu0 0
        %550 = vmatprep.subr.bf16.mxu0 0
        %551 = vmatpush1.bf16.xpose.msra.mxu0 0
        %552 = vmatprep.subr.bf16.mxu0 0
        %553 = vmatpush1.bf16.xpose.msra.mxu0 0
        %554 = vmatprep.subr.bf16.mxu0 0
        %555 = vmatpush1.bf16.xpose.msra.mxu0 0
        %556 = vmatprep.subr.bf16.mxu0 0
        %557 = vmatpush1.bf16.xpose.msra.mxu0 0
        %558 = vmatprep.subr.bf16.mxu0 0
        %559 = vmatpush1.bf16.xpose.msra.mxu0 0
        %560 = vmatprep.mubr.bf16.mxu0 0
        %561 = vmatmul.mubr.bf16.gmra.mrb[0].mxu0 %v523
        %v562 = vpop.f32.mrb[0].mxu0
        %v563 = vadd.f32 0.0, %v562
        %v564 = vpop.f32.mrb[0].mxu0
        %v565 = vpop.f32.mrb[0].mxu0
        %v566 = vpop.f32.mrb[0].mxu0
        %567 = vdwg.mxu0
        %v568 = vsel %vm204, %v425, -inf
        %569 = vmax.xlane.f32.xlu0 %v568
        %v570 = vpop.xlane.xlu0 %569
        %v571 = vsel %vm204, %v471, -inf
        %572 = vmax.xlane.f32.xlu0 %v571
        %v573 = vpop.xlane.xlu0 %572
        %v574 = vsel %vm204, %v517, -inf
        %575 = vmax.xlane.f32.xlu0 %v574
        %v576 = vpop.xlane.xlu0 %575
        %v577 = vsel %vm204, %v563, -inf
        %578 = vmax.xlane.f32.xlu0 %v577
        %v579 = vpop.xlane.xlu0 %578
        %v580 = vsub.f32 %v425, %v570
        %v581 = vsub.f32 %v471, %v573
        %v582 = vsub.f32 %v517, %v576
        %v583 = vsub.f32 %v563, %v579
        %v584 = vmul.f32 %v580, 1.442695
        %v585 = vpow.pop %v584
        %v586 = vmul.f32 %v581, 1.442695
        %v587 = vpow.pop %v586
        %v588 = vmul.f32 %v582, 1.442695
        %v589 = vpow.pop %v588
        %v590 = vmul.f32 %v583, 1.442695
        %v591 = vpow.pop %v590
        %v592 = vsel %vm204, %v585, 0.0
        %593 = vadd.xlane.f32.xlu0 %v592
        %v594 = vpop.xlane.xlu0 %593
        %v595 = vsel %vm204, %v587, 0.0
        %596 = vadd.xlane.f32.xlu0 %v595
        %v597 = vpop.xlane.xlu0 %596
        %v598 = vsel %vm204, %v589, 0.0
        %599 = vadd.xlane.f32.xlu0 %v598
        %v600 = vpop.xlane.xlu0 %599
        %v601 = vsel %vm204, %v591, 0.0
        %602 = vadd.xlane.f32.xlu0 %v601
        %v603 = vpop.xlane.xlu0 %602
        %v604 = vrcp.pop %v594
        %v605 = vrcp.pop %v597
        %v606 = vrcp.pop %v600
        %v607 = vrcp.pop %v603
        %v608 = vmul.f32 %v585, %v604
        %v609 = vmul.f32 %v587, %v605
        %v610 = vmul.f32 %v589, %v606
        %v611 = vmul.f32 %v591, %v607
        %v612 = vpack.c.bf16 %v608, %v608
        %v613 = vpack.c.bf16 %v609, %v609
        %v614 = vpack.c.bf16 %v610, %v610
        %v615 = vpack.c.bf16 %v611, %v611
        %v617 = vsel %vm204, %v612, 0
        %v620 = vsel %vm211, %v380, 0
        %622 = vmatprep.subr.bf16.mxu0 0
        %623 = vmatpush1.bf16.msra.mxu0 %v620
        %624 = vmatprep.subr.bf16.mxu0 0
        %625 = vmatpush1.bf16.msra.mxu0 0
        %626 = vmatprep.subr.bf16.mxu0 0
        %627 = vmatpush1.bf16.msra.mxu0 0
        %628 = vmatprep.subr.bf16.mxu0 0
        %629 = vmatpush1.bf16.msra.mxu0 0
        %630 = vmatprep.subr.bf16.mxu0 0
        %631 = vmatpush1.bf16.msra.mxu0 0
        %632 = vmatprep.subr.bf16.mxu0 0
        %633 = vmatpush1.bf16.msra.mxu0 0
        %634 = vmatprep.subr.bf16.mxu0 0
        %635 = vmatpush1.bf16.msra.mxu0 0
        %636 = vmatprep.subr.bf16.mxu0 0
        %637 = vmatpush1.bf16.msra.mxu0 0
        %638 = vmatprep.subr.bf16.mxu0 0
        %639 = vmatpush1.bf16.msra.mxu0 0
        %640 = vmatprep.subr.bf16.mxu0 0
        %641 = vmatpush1.bf16.msra.mxu0 0
        %642 = vmatprep.subr.bf16.mxu0 0
        %643 = vmatpush1.bf16.msra.mxu0 0
        %644 = vmatprep.subr.bf16.mxu0 0
        %645 = vmatpush1.bf16.msra.mxu0 0
        %646 = vmatprep.subr.bf16.mxu0 0
        %647 = vmatpush1.bf16.msra.mxu0 0
        %648 = vmatprep.subr.bf16.mxu0 0
        %649 = vmatpush1.bf16.msra.mxu0 0
        %650 = vmatprep.subr.bf16.mxu0 0
        %651 = vmatpush1.bf16.msra.mxu0 0
        %652 = vmatprep.subr.bf16.mxu0 0
        %653 = vmatpush1.bf16.msra.mxu0 0
        %654 = vmatprep.mubr.bf16.mxu0 0
        %655 = vmatmul.mubr.bf16.gmra.mrb[0].mxu0 %v617
        %v656 = vpop.f32.mrb[0].mxu0
        %v657 = vadd.f32 0.0, %v656
        %v658 = vpop.f32.mrb[0].mxu0
        %v659 = vpop.f32.mrb[0].mxu0
        %v660 = vpop.f32.mrb[0].mxu0
        %661 = vdwg.mxu0
        %v663 = vsel %vm204, %v613, 0
        %v666 = vsel %vm211, %v381, 0
        %668 = vmatprep.subr.bf16.mxu0 0
        %669 = vmatpush1.bf16.msra.mxu0 %v666
        %670 = vmatprep.subr.bf16.mxu0 0
        %671 = vmatpush1.bf16.msra.mxu0 0
        %672 = vmatprep.subr.bf16.mxu0 0
        %673 = vmatpush1.bf16.msra.mxu0 0
        %674 = vmatprep.subr.bf16.mxu0 0
        %675 = vmatpush1.bf16.msra.mxu0 0
        %676 = vmatprep.subr.bf16.mxu0 0
        %677 = vmatpush1.bf16.msra.mxu0 0
        %678 = vmatprep.subr.bf16.mxu0 0
        %679 = vmatpush1.bf16.msra.mxu0 0
        %680 = vmatprep.subr.bf16.mxu0 0
        %681 = vmatpush1.bf16.msra.mxu0 0
        %682 = vmatprep.subr.bf16.mxu0 0
        %683 = vmatpush1.bf16.msra.mxu0 0
        %684 = vmatprep.subr.bf16.mxu0 0
        %685 = vmatpush1.bf16.msra.mxu0 0
        %686 = vmatprep.subr.bf16.mxu0 0
        %687 = vmatpush1.bf16.msra.mxu0 0
        %688 = vmatprep.subr.bf16.mxu0 0
        %689 = vmatpush1.bf16.msra.mxu0 0
        %690 = vmatprep.subr.bf16.mxu0 0
        %691 = vmatpush1.bf16.msra.mxu0 0
        %692 = vmatprep.subr.bf16.mxu0 0
        %693 = vmatpush1.bf16.msra.mxu0 0
        %694 = vmatprep.subr.bf16.mxu0 0
        %695 = vmatpush1.bf16.msra.mxu0 0
        %696 = vmatprep.subr.bf16.mxu0 0
        %697 = vmatpush1.bf16.msra.mxu0 0
        %698 = vmatprep.subr.bf16.mxu0 0
        %699 = vmatpush1.bf16.msra.mxu0 0
        %700 = vmatprep.mubr.bf16.mxu0 0
        %701 = vmatmul.mubr.bf16.gmra.mrb[0].mxu0 %v663
        %v702 = vpop.f32.mrb[0].mxu0
        %v703 = vadd.f32 0.0, %v702
        %v704 = vpop.f32.mrb[0].mxu0
        %v705 = vpop.f32.mrb[0].mxu0
        %v706 = vpop.f32.mrb[0].mxu0
        %707 = vdwg.mxu0
        %v709 = vsel %vm204, %v614, 0
        %v712 = vsel %vm211, %v382, 0
        %714 = vmatprep.subr.bf16.mxu0 0
        %715 = vmatpush1.bf16.msra.mxu0 %v712
        %716 = vmatprep.subr.bf16.mxu0 0
        %717 = vmatpush1.bf16.msra.mxu0 0
        %718 = vmatprep.subr.bf16.mxu0 0
        %719 = vmatpush1.bf16.msra.mxu0 0
        %720 = vmatprep.subr.bf16.mxu0 0
        %721 = vmatpush1.bf16.msra.mxu0 0
        %722 = vmatprep.subr.bf16.mxu0 0
        %723 = vmatpush1.bf16.msra.mxu0 0
        %724 = vmatprep.subr.bf16.mxu0 0
        %725 = vmatpush1.bf16.msra.mxu0 0
        %726 = vmatprep.subr.bf16.mxu0 0
        %727 = vmatpush1.bf16.msra.mxu0 0
        %728 = vmatprep.subr.bf16.mxu0 0
        %729 = vmatpush1.bf16.msra.mxu0 0
        %730 = vmatprep.subr.bf16.mxu0 0
        %731 = vmatpush1.bf16.msra.mxu0 0
        %732 = vmatprep.subr.bf16.mxu0 0
        %733 = vmatpush1.bf16.msra.mxu0 0
        %734 = vmatprep.subr.bf16.mxu0 0
        %735 = vmatpush1.bf16.msra.mxu0 0
        %736 = vmatprep.subr.bf16.mxu0 0
        %737 = vmatpush1.bf16.msra.mxu0 0
        %738 = vmatprep.subr.bf16.mxu0 0
        %739 = vmatpush1.bf16.msra.mxu0 0
        %740 = vmatprep.subr.bf16.mxu0 0
        %741 = vmatpush1.bf16.msra.mxu0 0
        %742 = vmatprep.subr.bf16.mxu0 0
        %743 = vmatpush1.bf16.msra.mxu0 0
        %744 = vmatprep.subr.bf16.mxu0 0
        %745 = vmatpush1.bf16.msra.mxu0 0
        %746 = vmatprep.mubr.bf16.mxu0 0
        %747 = vmatmul.mubr.bf16.gmra.mrb[0].mxu0 %v709
        %v748 = vpop.f32.mrb[0].mxu0
        %v749 = vadd.f32 0.0, %v748
        %v750 = vpop.f32.mrb[0].mxu0
        %v751 = vpop.f32.mrb[0].mxu0
        %v752 = vpop.f32.mrb[0].mxu0
        %753 = vdwg.mxu0
        %v755 = vsel %vm204, %v615, 0
        %v758 = vsel %vm211, %v383, 0
        %760 = vmatprep.subr.bf16.mxu0 0
        %761 = vmatpush1.bf16.msra.mxu0 %v758
        %762 = vmatprep.subr.bf16.mxu0 0
        %763 = vmatpush1.bf16.msra.mxu0 0
        %764 = vmatprep.subr.bf16.mxu0 0
        %765 = vmatpush1.bf16.msra.mxu0 0
        %766 = vmatprep.subr.bf16.mxu0 0
        %767 = vmatpush1.bf16.msra.mxu0 0
        %768 = vmatprep.subr.bf16.mxu0 0
        %769 = vmatpush1.bf16.msra.mxu0 0
        %770 = vmatprep.subr.bf16.mxu0 0
        %771 = vmatpush1.bf16.msra.mxu0 0
        %772 = vmatprep.subr.bf16.mxu0 0
        %773 = vmatpush1.bf16.msra.mxu0 0
        %774 = vmatprep.subr.bf16.mxu0 0
        %775 = vmatpush1.bf16.msra.mxu0 0
        %776 = vmatprep.subr.bf16.mxu0 0
        %777 = vmatpush1.bf16.msra.mxu0 0
        %778 = vmatprep.subr.bf16.mxu0 0
        %779 = vmatpush1.bf16.msra.mxu0 0
        %780 = vmatprep.subr.bf16.mxu0 0
        %781 = vmatpush1.bf16.msra.mxu0 0
        %782 = vmatprep.subr.bf16.mxu0 0
        %783 = vmatpush1.bf16.msra.mxu0 0
        %784 = vmatprep.subr.bf16.mxu0 0
        %785 = vmatpush1.bf16.msra.mxu0 0
        %786 = vmatprep.subr.bf16.mxu0 0
        %787 = vmatpush1.bf16.msra.mxu0 0
        %788 = vmatprep.subr.bf16.mxu0 0
        %789 = vmatpush1.bf16.msra.mxu0 0
        %790 = vmatprep.subr.bf16.mxu0 0
        %791 = vmatpush1.bf16.msra.mxu0 0
        %792 = vmatprep.mubr.bf16.mxu0 0
        %793 = vmatmul.mubr.bf16.gmra.mrb[0].mxu0 %v755
        %v794 = vpop.f32.mrb[0].mxu0
        %v795 = vadd.f32 0.0, %v794
        %v796 = vpop.f32.mrb[0].mxu0
        %v797 = vpop.f32.mrb[0].mxu0
        %v798 = vpop.f32.mrb[0].mxu0
        %799 = vdwg.mxu0
        %801 = vrot.lane.b32.xlu0 %v703, 8
        %v802 = vpop.permute.xlu0 %801
        %805 = vrot.lane.b32.xlu0 %v749, 16
        %v806 = vpop.permute.xlu0 %805
        %809 = vrot.lane.b32.xlu0 %v795, 24
        %v810 = vpop.permute.xlu0 %809
        %v812 = vsel %vm204, %v657, %v802
        %vm813 = vcmask 130048
        %v814 = vsel %vm813, %v812, %v806
        %vm815 = vcmask 195584
        %v816 = vsel %vm815, %v814, %v810
        %v817 = vpack.c.bf16 %v816, %v816
        %v818 = vld [vmem:[%s2] sm:$0xf]
        %v819 = vld [vmem:[%s2 + $0x4] sm:$0xf]
        %v820 = vld [vmem:[%s2 + $0x8] sm:$0xf]
        %v821 = vld [vmem:[%s2 + $0xc] sm:$0xf]
        %v822 = vld [vmem:[%s3] sm:$0x1]
        %v824 = vlaneseq
        %v825 = vshrl.u32 %v824, 7
        %v826 = vsub.s32 0, %v825
        %v827 = vrot.slane %v822, %v826
        %v833 = vunpack.c.l.b16 %v818
        %v834 = vunpack.c.l.b16 %v819
        %v835 = vunpack.c.l.b16 %v820
        %v836 = vunpack.c.l.b16 %v821
        %v837 = vpack.c.b16 %v834, %v833
        %v838 = vpack.c.b16 %v836, %v835
        %vm841 = vcmask 261120
        %v843 = vsel %vm841, %v817, 0
        %845 = vmatprep.subr.bf16.mxu0 0
        %846 = vmatpush1.bf16.msra.mxu0 %v837
        %847 = vmatprep.subr.bf16.mxu0 0
        %848 = vmatpush1.bf16.msra.mxu0 %v838
        %849 = vmatprep.subr.bf16.mxu0 0
        %850 = vmatpush1.bf16.msra.mxu0 0
        %851 = vmatprep.subr.bf16.mxu0 0
        %852 = vmatpush1.bf16.msra.mxu0 0
        %853 = vmatprep.subr.bf16.mxu0 0
        %854 = vmatpush1.bf16.msra.mxu0 0
        %855 = vmatprep.subr.bf16.mxu0 0
        %856 = vmatpush1.bf16.msra.mxu0 0
        %857 = vmatprep.subr.bf16.mxu0 0
        %858 = vmatpush1.bf16.msra.mxu0 0
        %859 = vmatprep.subr.bf16.mxu0 0
        %860 = vmatpush1.bf16.msra.mxu0 0
        %861 = vmatprep.subr.bf16.mxu0 0
        %862 = vmatpush1.bf16.msra.mxu0 0
        %863 = vmatprep.subr.bf16.mxu0 0
        %864 = vmatpush1.bf16.msra.mxu0 0
        %865 = vmatprep.subr.bf16.mxu0 0
        %866 = vmatpush1.bf16.msra.mxu0 0
        %867 = vmatprep.subr.bf16.mxu0 0
        %868 = vmatpush1.bf16.msra.mxu0 0
        %869 = vmatprep.subr.bf16.mxu0 0
        %870 = vmatpush1.bf16.msra.mxu0 0
        %871 = vmatprep.subr.bf16.mxu0 0
        %872 = vmatpush1.bf16.msra.mxu0 0
        %873 = vmatprep.subr.bf16.mxu0 0
        %874 = vmatpush1.bf16.msra.mxu0 0
        %875 = vmatprep.subr.bf16.mxu0 0
        %876 = vmatpush1.bf16.msra.mxu0 0
        %877 = vmatprep.mubr.bf16.mxu0 0
        %878 = vmatmul.mubr.bf16.gmra.mrb[0].mxu0 %v843
        %v879 = vpop.f32.mrb[0].mxu0
        %v880 = vadd.f32 %v827, %v879
        %v881 = vpop.f32.mrb[0].mxu0
        %v882 = vpop.f32.mrb[0].mxu0
        %v883 = vpop.f32.mrb[0].mxu0
        %884 = vdwg.mxu0
        %885 = vst.msk [vmem:[%s190] sm:$0xff] %vm841, %v880
        %s886 = sand.u32 %s115, 1
        %s887 = scalar_lea.sflag [#allocation3], %s886
        %s888 = sand.u32 %s115, 1
        %s889 = smul.addr %s888, 8
        %s890 = scalar_lea.vmem [#allocation2], %s889
        // Predicated region
        $region37: #{self_attention_narrow.1} parent=35 // pred_check
          %p891 = pneg %p125
        $region38: #{self_attention_narrow.1} parent=35 // pred_check_branch
          %893 = sbr.rel (%p891) target = $region40
        $region39: #{self_attention_narrow.1} parent=35 // pred_region
          %s895 = ssub.s32 128, 128
          %896 = vsyncadd %s887, %s895
          %s897 = smul.addr %s18, 128
          %s898 = scalar_lea.hbm %s4, %s897
          %s900 = sshll.u32 %s890, 4
          %s901 = int_to_ptr.vmem [resolvable:$true] %s900
          %903 = dma.vmem_to_hbm [thread:$0]  %s901, 128, %s898, %s887
        $region40: #{self_attention_narrow.1} parent=35 // pred_fallthru
          _
      $region36: #{self_attention_narrow.1} parent=5 // pred_fallthru
        _
      %p904 = scmp.le.s32.totalorder 2, %s13
      // Predicated region
      $region41: #{self_attention_narrow.1} parent=5 // pred_check
        %p905 = pneg %p904
      $region42: #{self_attention_narrow.1} parent=5 // pred_check_branch
        %907 = sbr.rel (%p905) target = $region44
      $region43: #{self_attention_narrow.1} parent=5 // pred_region
        %s908 = ssub.s32 %s13, 2
        // Predicated region
        $region45: #{self_attention_narrow.1} parent=43 // pred_check
          %p909 = pneg %p131
        $region46: #{self_attention_narrow.1} parent=43 // pred_check_branch
          %911 = sbr.rel (%p909) target = $region48
        $region47: #{self_attention_narrow.1} parent=43 // pred_region
          %s912 = sand.u32 %s116, 1
          %s913 = scalar_lea.sflag [#allocation3], %s912
          %s914 = sand.u32 %s116, 1
          %s915 = smul.addr %s914, 8
          %s916 = scalar_lea.vmem [#allocation2], %s915
          %917 = dma.done %s913, 128
        $region48: #{self_attention_narrow.1} parent=43 // pred_fallthru
          _
      $region44: #{self_attention_narrow.1} parent=5 // pred_fallthru
        _
    $region6: #{self_attention_narrow.1} parent=1 // loop_footer
      %s17 = sadd.s32 1, %s13
    $region7: #{self_attention_narrow.1} parent=1 // loop_footer_branch
      %12 = sbr.rel target = $region3
    $region8: #{self_attention_narrow.1} parent=1 // loop_exit
      _
    %918 = vsyncpa [#allocation3], 1
    %s919 = scalar_lea.sflag [#allocation3], 1
    %920 = vsyncpa %s919, 1

</llo_original>
